<compile_context>
chip_gen: v5e
topology: v5e:2x2
jax: 0.10.0
libtpu: 0.0.40
codegen_flags: <defaults>
</compile_context>

<pallas_src>
import math
import jax
import jax.numpy as jnp
from jax.experimental import pallas as pl
from jax.experimental.pallas import tpu as pltpu

# ----------------------- hyperparameters (small shapes) -----------------------
B, S, D = 2, 8, 32          # batch, seq, d_model
R = B * S                   # fused (batch*seq) rows = 16
N_HEADS = 4
HD = D // N_HEADS           # 8
MLP_SCALE = 2.0
HID = int(MLP_SCALE * D)    # GatedMLP hidden features = 64
K = 8                       # num_eigh (spectral filters)
PADDED_SL = 16              # padded length for FFT linear conv (>= 2S-1), ref only
EPS = 1e-5
NEG_INF = -1e30

# ---------------------- packed operand slab layout (f32) ----------------------
# Slab A: rows = D (input-dim weights), every segment starts on a 128-lane boundary.
A_MALL = 0                  # (D, 2K*D) = (32, 512)  merged, sigma/rn_1-folded M_phi
A_W1A = 512                 # (D, 2*HID) = (32, 128) mlp_1 fc1 (rn_2 folded)
A_W1B = 640                 # (32, 128)              mlp_2 fc1 (rn_4 folded)
A_WQKV = 768                # (32, 96)               attn qkv (rn_3 + 1/sqrt(HD) folded)
A_WO = 896                  # (32, 32)               attn out projection
WA = 1024

# Slab B: rows = HID (= N_HEADS*R = 64 here).
B_W2A = 0                   # (HID, D) mlp_1 fc2
B_W2B = 128                 # (HID, D) mlp_2 fc2
B_HMASK = 256               # (N_HEADS*R, D) per-head lane mask (1.0 where d in head)
WB = 384

# Slab C: rows = R.
C_TWIDE = 0                 # (R, 2K*R) batch-block-diag causal Toeplitz operator
C_ABIAS = 256               # (R, N_HEADS*R) additive causal + batch attention mask
WC = 384

# Slab D: one bias per row, lane offset 0.
D_B1A, D_B1B, D_BQKV, D_BO, D_B2A, D_B2B = 0, 1, 2, 3, 4, 5
WD_ROWS, WD = 8, 128


# ============================ fused Pallas kernel =============================

def hybrid_block_kernel(x_ref, a_ref, b_ref, c_ref, d_ref, o_ref):
    x = x_ref[...]                          # (R, D): both batches, all positions
    z = x

    def rms(v):                             # per-channel weight folded into consumer
        ms = jnp.mean(v * v, axis=-1, keepdims=True)
        return v * jax.lax.rsqrt(ms + EPS)

    def gated_mlp(v, w1, b1, w2, b2):
        y = jnp.dot(v, w1, preferred_element_type=jnp.float32) + b1
        h = y[:, :HID] * jax.nn.silu(y[:, HID:])
        return jnp.dot(h, w2, preferred_element_type=jnp.float32) + b2

    # -------- STU (spectral branch only; use_ar_u = use_ar_y = False) --------
    # spectral = sum_j T_j @ (xn @ M_j) collapsed into 2 MXU passes:
    #   y    = xn @ [M_0 | ... | M_{2K-1}]                       (R, 2K*D)
    #   spec = [T_0^bd | ... | T_{2K-1}^bd] @ stack_j(y_j)        (R, D)
    xn = rms(x)
    y = jnp.dot(xn, a_ref[:, A_MALL:A_MALL + 2 * K * D],
                preferred_element_type=jnp.float32)                       # (R, 2K*D)
    ytall = jnp.concatenate(
        [y[:, j * D:(j + 1) * D] for j in range(2 * K)], axis=0)          # (2K*R, D)
    spec = jnp.dot(c_ref[:, C_TWIDE:C_TWIDE + 2 * K * R], ytall,
                   preferred_element_type=jnp.float32)                    # (R, D)
    x = x + spec

    # --------------------------------- MLP 1 ---------------------------------
    x = x + gated_mlp(rms(x),
                      a_ref[:, A_W1A:A_W1A + 2 * HID],
                      d_ref[D_B1A:D_B1A + 1, :],
                      b_ref[0:HID, B_W2A:B_W2A + D],
                      d_ref[D_B2A:D_B2A + 1, :D]) + z

    # --------------- causal multi-head attention (all heads at once) ----------
    xn = rms(x)
    qkv = (jnp.dot(xn, a_ref[:, A_WQKV:A_WQKV + 3 * D],
                   preferred_element_type=jnp.float32)
           + d_ref[D_BQKV:D_BQKV + 1, :3 * D])                            # (R, 3D)
    q = qkv[:, :D]                       # 1/sqrt(HD) already folded into Wq/bq
    k = qkv[:, D:2 * D]
    v = qkv[:, 2 * D:3 * D]

    hmask = b_ref[0:N_HEADS * R, B_HMASK:B_HMASK + D]       # (N_HEADS*R, D)
    kt = jnp.concatenate([k] * N_HEADS, axis=0) * hmask     # head-stacked, lane-masked K
    vt = jnp.concatenate([v] * N_HEADS, axis=0) * hmask     # head-stacked, lane-masked V

    s = jnp.einsum('qd,cd->qc', q, kt,
                   preferred_element_type=jnp.float32)      # (R, N_HEADS*R) scores
    s = s + c_ref[:, C_ABIAS:C_ABIAS + N_HEADS * R]         # causal + batch mask (additive)
    s = s - jnp.max(s, axis=-1, keepdims=True)               # same shift per head -> exact
    p = jnp.exp(s)
    o_un = jnp.dot(p, vt, preferred_element_type=jnp.float32)    # unnormalized PV
    den = jnp.dot(p, hmask, preferred_element_type=jnp.float32)  # per-head softmax denoms
    o = o_un * pl.reciprocal(den, approx=True)
    x = x + jnp.dot(o, a_ref[:, A_WO:A_WO + D],
                    preferred_element_type=jnp.float32) + d_ref[D_BO:D_BO + 1, :D]

    # --------------------------------- MLP 2 ---------------------------------
    x = x + gated_mlp(rms(x),
                      a_ref[:, A_W1B:A_W1B + 2 * HID],
                      d_ref[D_B1B:D_B1B + 1, :],
                      b_ref[0:HID, B_W2B:B_W2B + D],
                      d_ref[D_B2B:D_B2B + 1, :D]) + z

    o_ref[...] = x


# ================================ JAX wrapper =================================

def hybrid_block(x, p):
    x2 = x.reshape(R, D)                 # wrapper-side reshape (outside the kernel)
    out = pl.pallas_call(
        hybrid_block_kernel,
        out_shape=jax.ShapeDtypeStruct((R, D), jnp.float32),
        grid=(1,),                       # single fused invocation (review item 1)
        in_specs=[
            pl.BlockSpec((R, D), lambda i: (0, 0)),            # x (both batches fused)
            pl.BlockSpec((D, WA), lambda i: (0, 0)),            # slab A
            pl.BlockSpec((HID, WB), lambda i: (0, 0)),          # slab B
            pl.BlockSpec((R, WC), lambda i: (0, 0)),            # slab C
            pl.BlockSpec((WD_ROWS, WD), lambda i: (0, 0)),      # slab D (biases)
        ],
        out_specs=pl.BlockSpec((R, D), lambda i: (0, 0)),
        compiler_params=pltpu.CompilerParams(
            dimension_semantics=("arbitrary",)),
    )(x2, p['slab_a'], p['slab_b'], p['slab_c'], p['slab_d'])
    return out.reshape(B, S, D)


# --------------------------- STU spectral machinery ---------------------------

def get_spectral_filters(sl, k):
    """Top-k eigenpairs of the Hankel matrix Z[i,j] = 2/((i+j)^3-(i+j))."""
    i = jnp.arange(1, sl + 1, dtype=jnp.float32)
    s = i[:, None] + i[None, :]
    Z = 2.0 / (s ** 3 - s)
    evals, evecs = jnp.linalg.eigh(Z)          # init-time only, plain JAX
    return evals[-k:].astype(jnp.float32), evecs[:, -k:].astype(jnp.float32)


# ------------------------------ parameter init --------------------------------

def init_raw_params(key):
    ks = jax.random.split(key, 12)
    scale = 0.02
    sigma, V = get_spectral_filters(S, K)

    def nrm(k, shape):
        return (scale * jax.random.normal(k, shape)).astype(jnp.float32)

    def mlp_params(k):
        k1, k2, k3, k4 = jax.random.split(k, 4)
        return {'w1': nrm(k1, (D, 2 * HID)), 'b1': nrm(k2, (1, 2 * HID)),
                'w2': nrm(k3, (HID, D)), 'b2': nrm(k4, (1, D))}

    # M_u / M_y of the PyTorch STU are unused here (use_ar_u = use_ar_y = False).
    return {
        'rn': jnp.ones((4, D), jnp.float32),
        'sigma': sigma, 'V': V,
        'Mp': nrm(ks[0], (K, D, D)), 'Mm': nrm(ks[1], (K, D, D)),
        'attn': {'wqkv': nrm(ks[2], (D, 3 * D)), 'bqkv': nrm(ks[3], (1, 3 * D)),
                 'wo': nrm(ks[4], (D, D)), 'bo': nrm(ks[5], (1, D))},
        'mlp1': mlp_params(ks[6]),
        'mlp2': mlp_params(ks[7]),
    }


def prepare_params(raw):
    """Fold scales / norms, build block-diagonal operators and masks, pack slabs."""
    rn = raw['rn']

    # Merged spectral projection: sigma**0.25 and rn_1 folded in.
    sr = (raw['sigma'] ** 0.25).reshape(K, 1, 1)
    Mall = jnp.concatenate([raw['Mp'] * sr, raw['Mm'] * sr], axis=0)       # (2K, D, D)
    mall = jnp.transpose(Mall, (1, 0, 2)).reshape(D, 2 * K * D)            # [i, j*D+o]
    mall = rn[0][:, None] * mall

    # Causal Toeplitz filters, batch-block-diagonal, laid out wide:
    #   twide[(b,t), j*R + b'*S + s] = [b==b'] * T_j[t, s]
    t = jnp.arange(S)[:, None]
    s_ = jnp.arange(S)[None, :]
    diff = t - s_
    causal = diff >= 0
    Vg = raw['V'][jnp.clip(diff, 0, S - 1)]                                # (S, S, K)
    Tp = jnp.where(causal[..., None], Vg, 0.0)
    sgn = jnp.where(diff % 2 == 0, 1.0, -1.0)[..., None]
    Tm = jnp.where(causal[..., None], Vg * sgn, 0.0)
    Tall = jnp.concatenate([jnp.transpose(Tp, (2, 0, 1)),
                            jnp.transpose(Tm, (2, 0, 1))], axis=0)         # (2K, S, S)
    twide = jnp.einsum('jts,bc->btjcs', Tall,
                       jnp.eye(B, dtype=jnp.float32)).reshape(R, 2 * K * R)

    # Attention weights: fold rn_3 and 1/sqrt(HD) into q columns.
    scale = 1.0 / math.sqrt(HD)
    wqkv = raw['attn']['wqkv'].at[:, :D].multiply(scale)
    bqkv = raw['attn']['bqkv'].at[:, :D].multiply(scale)
    wqkv = rn[2][:, None] * wqkv

    # Per-head lane mask (N_HEADS*R, D) and additive causal+batch mask (R, N_HEADS*R).
    head_of_col = jnp.arange(D) // HD
    head_of_row = jnp.repeat(jnp.arange(N_HEADS), R)
    headmask = (head_of_row[:, None] == head_of_col[None, :]).astype(jnp.float32)

    r = jnp.arange(R)
    bq, tq = r // S, r % S
    ok = (bq[:, None] == bq[None, :]) & (tq[None, :] <= tq[:, None])       # (R, R)
    ok = jnp.tile(ok, (1, N_HEADS))                                        # (R, N_HEADS*R)
    abias = jnp.where(ok, 0.0, NEG_INF).astype(jnp.float32)

    # MLPs: fold rn_2 / rn_4 into fc1 rows.
    w1a = rn[1][:, None] * raw['mlp1']['w1']
    w1b = rn[3][:, None] * raw['mlp2']['w1']

    def place(slab, r0, c0, w):
        return slab.at[r0:r0 + w.shape[0], c0:c0 + w.shape[1]].set(w)

    A = jnp.zeros((D, WA), jnp.float32)
    A = place(A, 0, A_MALL, mall)
    A = place(A, 0, A_W1A, w1a)
    A = place(A, 0, A_W1B, w1b)
    A = place(A, 0, A_WQKV, wqkv)
    A = place(A, 0, A_WO, raw['attn']['wo'])

    Bs = jnp.zeros((HID, WB), jnp.float32)        # HID == N_HEADS*R == 64 at these shapes
    Bs = place(Bs, 0, B_W2A, raw['mlp1']['w2'])
    Bs = place(Bs, 0, B_W2B, raw['mlp2']['w2'])
    Bs = place(Bs, 0, B_HMASK, headmask)

    C = jnp.zeros((R, WC), jnp.float32)
    C = place(C, 0, C_TWIDE, twide)
    C = place(C, 0, C_ABIAS, abias)

    Ds = jnp.zeros((WD_ROWS, WD), jnp.float32)
    Ds = place(Ds, D_B1A, 0, raw['mlp1']['b1'])
    Ds = place(Ds, D_B1B, 0, raw['mlp2']['b1'])
    Ds = place(Ds, D_BQKV, 0, bqkv)
    Ds = place(Ds, D_BO, 0, raw['attn']['bo'])
    Ds = place(Ds, D_B2A, 0, raw['mlp1']['b2'])
    Ds = place(Ds, D_B2B, 0, raw['mlp2']['b2'])

    return {'slab_a': A, 'slab_b': Bs, 'slab_c': C, 'slab_d': Ds}


# ---------------------- pure-JAX reference (for checking) ---------------------

def reference_block(x, raw):
    def rms(v, w):
        return v * jax.lax.rsqrt(jnp.mean(v * v, -1, keepdims=True) + EPS) * w

    def mlp(v, p):
        y = v @ p['w1'] + p['b1']
        return (y[..., :HID] * jax.nn.silu(y[..., HID:])) @ p['w2'] + p['b2']

    def attn(v, p):
        qkv = v @ p['wqkv'] + p['bqkv']
        q, k, vv = jnp.split(qkv, 3, axis=-1)
        q = q.reshape(B, S, N_HEADS, HD).transpose(0, 2, 1, 3)
        k = k.reshape(B, S, N_HEADS, HD).transpose(0, 2, 1, 3)
        vv = vv.reshape(B, S, N_HEADS, HD).transpose(0, 2, 1, 3)
        sc = jnp.einsum('bhqd,bhkd->bhqk', q, k) / math.sqrt(HD)
        mask = jnp.tril(jnp.ones((S, S), bool))
        sc = jnp.where(mask, sc, -jnp.inf)
        pr = jax.nn.softmax(sc, axis=-1)
        o = jnp.einsum('bhqk,bhkd->bhqd', pr, vv).transpose(0, 2, 1, 3).reshape(B, S, D)
        return o @ p['wo'] + p['bo']

    def stu(v):
        sgn = jnp.where(jnp.arange(S) % 2 == 0, 1.0, -1.0)
        Vf = jnp.fft.rfft(raw['V'], n=PADDED_SL, axis=0)

        def conv(inp):
            Uf = jnp.fft.rfft(inp, n=PADDED_SL, axis=1)
            prod = Vf[None, :, :, None] * Uf[:, :, None, :]
            return jnp.fft.irfft(prod, n=PADDED_SL, axis=1)[:, :S]

        Up = conv(v)
        Um = conv(v * sgn[None, :, None]) * sgn[None, :, None, None]
        sr = (raw['sigma'] ** 0.25).reshape(1, 1, K, 1)
        return (jnp.einsum('blki,kio->blo', Up * sr, raw['Mp'])
                + jnp.einsum('blki,kio->blo', Um * sr, raw['Mm']))

    z = x
    x = x + stu(rms(x, raw['rn'][0]))
    x = x + mlp(rms(x, raw['rn'][1]), raw['mlp1']) + z
    x = x + attn(rms(x, raw['rn'][2]), raw['attn'])
    x = x + mlp(rms(x, raw['rn'][3]), raw['mlp2']) + z
    return x


if __name__ == "__main__":
    key = jax.random.PRNGKey(0)
    kx, kp = jax.random.split(key)
    x = jax.random.normal(kx, (B, S, D), dtype=jnp.float32)
    raw = init_raw_params(kp)
    params = prepare_params(raw)

    out = jax.block_until_ready(jax.jit(hybrid_block)(x, params))
    assert out.shape == (B, S, D) and out.dtype == jnp.float32
    assert bool(jnp.all(jnp.isfinite(out)))

    ref = reference_block(x, raw)
    err = float(jnp.max(jnp.abs(out - ref)))
    assert err < 1e-2, f"mismatch vs reference: max abs err = {err}"
    print("KERNEL_OK")
</pallas_src>

<mosaic_0001>
module attributes {stable_mosaic.version = 11 : i64} {
  func.func @hybrid_block_kernel(%arg0: i32, %arg1: memref<16x32xf32, #tpu.memory_space<vmem>>, %arg2: memref<32x1024xf32, #tpu.memory_space<vmem>>, %arg3: memref<64x384xf32, #tpu.memory_space<vmem>>, %arg4: memref<16x384xf32, #tpu.memory_space<vmem>>, %arg5: memref<8x128xf32, #tpu.memory_space<vmem>>, %arg6: memref<16x32xf32, #tpu.memory_space<vmem>>) attributes {dimension_semantics = [#tpu.dimension_semantics<arbitrary>], iteration_bounds = array<i64: 1>, scalar_prefetch = 0 : i64, scratch_operands = 0 : i64, tpu.core_type = #tpu.core_type<tc>, window_params = [{pipeline_mode = #tpu.pipeline_mode<synchronous>, transform_indices = @transform_0, window_bounds = array<i64: 16, 32>}, {pipeline_mode = #tpu.pipeline_mode<synchronous>, transform_indices = @transform_1, window_bounds = array<i64: 32, 1024>}, {pipeline_mode = #tpu.pipeline_mode<synchronous>, transform_indices = @transform_2, window_bounds = array<i64: 64, 384>}, {pipeline_mode = #tpu.pipeline_mode<synchronous>, transform_indices = @transform_3, window_bounds = array<i64: 16, 384>}, {pipeline_mode = #tpu.pipeline_mode<synchronous>, transform_indices = @transform_4, window_bounds = array<i64: 8, 128>}, {pipeline_mode = #tpu.pipeline_mode<synchronous>, transform_indices = @transform_5, window_bounds = array<i64: 16, 32>}]} {
    %c0 = arith.constant 0 : index
    %c0_0 = arith.constant 0 : index
    %0 = vector.load %arg1[%c0, %c0_0] : memref<16x32xf32, #tpu.memory_space<vmem>>, vector<16x32xf32>
    %1 = arith.mulf %0, %0 : vector<16x32xf32>
    %cst = arith.constant dense<0.000000e+00> : vector<16xf32>
    %2 = vector.multi_reduction <add>, %1, %cst [1] : vector<16x32xf32> to vector<16xf32>
    %3 = vector.shape_cast %2 : vector<16xf32> to vector<16x1xf32>
    %cst_1 = arith.constant 3.200000e+01 : f32
    %4 = vector.broadcast %cst_1 : f32 to vector<16x1xf32>
    %5 = arith.divf %3, %4 : vector<16x1xf32>
    %cst_2 = arith.constant 9.99999974E-6 : f32
    %6 = vector.broadcast %cst_2 : f32 to vector<16x1xf32>
    %7 = arith.addf %5, %6 : vector<16x1xf32>
    %8 = math.rsqrt %7 : vector<16x1xf32>
    %9 = vector.broadcast %8 : vector<16x1xf32> to vector<16x32xf32>
    %10 = arith.mulf %0, %9 : vector<16x32xf32>
    %c0_3 = arith.constant 0 : index
    %c0_4 = arith.constant 0 : index
    %11 = vector.load %arg2[%c0_3, %c0_4] : memref<32x1024xf32, #tpu.memory_space<vmem>>, vector<32x512xf32>
    %cst_5 = arith.constant dense<0.000000e+00> : vector<16x512xf32>
    %12 = tpu.matmul %10, %11, %cst_5 {dimension_numbers = #tpu.dot_dimension_numbers<[1], [0], [0], [1], [0, 0, 1, 1], [], []>} : vector<16x32xf32>, vector<32x512xf32>, vector<16x512xf32> -> vector<16x512xf32>
    %13 = vector.extract_strided_slice %12 {offsets = [0, 0], sizes = [16, 32], strides = [1, 1]} : vector<16x512xf32> to vector<16x32xf32>
    %14 = vector.extract_strided_slice %12 {offsets = [0, 32], sizes = [16, 32], strides = [1, 1]} : vector<16x512xf32> to vector<16x32xf32>
    %15 = vector.extract_strided_slice %12 {offsets = [0, 64], sizes = [16, 32], strides = [1, 1]} : vector<16x512xf32> to vector<16x32xf32>
    %16 = vector.extract_strided_slice %12 {offsets = [0, 96], sizes = [16, 32], strides = [1, 1]} : vector<16x512xf32> to vector<16x32xf32>
    %17 = vector.extract_strided_slice %12 {offsets = [0, 128], sizes = [16, 32], strides = [1, 1]} : vector<16x512xf32> to vector<16x32xf32>
    %18 = vector.extract_strided_slice %12 {offsets = [0, 160], sizes = [16, 32], strides = [1, 1]} : vector<16x512xf32> to vector<16x32xf32>
    %19 = vector.extract_strided_slice %12 {offsets = [0, 192], sizes = [16, 32], strides = [1, 1]} : vector<16x512xf32> to vector<16x32xf32>
    %20 = vector.extract_strided_slice %12 {offsets = [0, 224], sizes = [16, 32], strides = [1, 1]} : vector<16x512xf32> to vector<16x32xf32>
    %21 = vector.extract_strided_slice %12 {offsets = [0, 256], sizes = [16, 32], strides = [1, 1]} : vector<16x512xf32> to vector<16x32xf32>
    %22 = vector.extract_strided_slice %12 {offsets = [0, 288], sizes = [16, 32], strides = [1, 1]} : vector<16x512xf32> to vector<16x32xf32>
    %23 = vector.extract_strided_slice %12 {offsets = [0, 320], sizes = [16, 32], strides = [1, 1]} : vector<16x512xf32> to vector<16x32xf32>
    %24 = vector.extract_strided_slice %12 {offsets = [0, 352], sizes = [16, 32], strides = [1, 1]} : vector<16x512xf32> to vector<16x32xf32>
    %25 = vector.extract_strided_slice %12 {offsets = [0, 384], sizes = [16, 32], strides = [1, 1]} : vector<16x512xf32> to vector<16x32xf32>
    %26 = vector.extract_strided_slice %12 {offsets = [0, 416], sizes = [16, 32], strides = [1, 1]} : vector<16x512xf32> to vector<16x32xf32>
    %27 = vector.extract_strided_slice %12 {offsets = [0, 448], sizes = [16, 32], strides = [1, 1]} : vector<16x512xf32> to vector<16x32xf32>
    %28 = vector.extract_strided_slice %12 {offsets = [0, 480], sizes = [16, 32], strides = [1, 1]} : vector<16x512xf32> to vector<16x32xf32>
    %29 = tpu.concatenate %13, %14, %15, %16, %17, %18, %19, %20, %21, %22, %23, %24, %25, %26, %27, %28 in 0 : vector<16x32xf32>, vector<16x32xf32>, vector<16x32xf32>, vector<16x32xf32>, vector<16x32xf32>, vector<16x32xf32>, vector<16x32xf32>, vector<16x32xf32>, vector<16x32xf32>, vector<16x32xf32>, vector<16x32xf32>, vector<16x32xf32>, vector<16x32xf32>, vector<16x32xf32>, vector<16x32xf32>, vector<16x32xf32> -> vector<256x32xf32>
    %c0_6 = arith.constant 0 : index
    %c0_7 = arith.constant 0 : index
    %30 = vector.load %arg4[%c0_6, %c0_7] : memref<16x384xf32, #tpu.memory_space<vmem>>, vector<16x256xf32>
    %cst_8 = arith.constant dense<0.000000e+00> : vector<16x32xf32>
    %31 = tpu.matmul %30, %29, %cst_8 {dimension_numbers = #tpu.dot_dimension_numbers<[1], [0], [0], [1], [0, 0, 1, 1], [], []>} : vector<16x256xf32>, vector<256x32xf32>, vector<16x32xf32> -> vector<16x32xf32>
    %32 = arith.addf %0, %31 : vector<16x32xf32>
    %33 = arith.mulf %32, %32 : vector<16x32xf32>
    %cst_9 = arith.constant dense<0.000000e+00> : vector<16xf32>
    %34 = vector.multi_reduction <add>, %33, %cst_9 [1] : vector<16x32xf32> to vector<16xf32>
    %35 = vector.shape_cast %34 : vector<16xf32> to vector<16x1xf32>
    %cst_10 = arith.constant 3.200000e+01 : f32
    %36 = vector.broadcast %cst_10 : f32 to vector<16x1xf32>
    %37 = arith.divf %35, %36 : vector<16x1xf32>
    %cst_11 = arith.constant 9.99999974E-6 : f32
    %38 = vector.broadcast %cst_11 : f32 to vector<16x1xf32>
    %39 = arith.addf %37, %38 : vector<16x1xf32>
    %40 = math.rsqrt %39 : vector<16x1xf32>
    %41 = vector.broadcast %40 : vector<16x1xf32> to vector<16x32xf32>
    %42 = arith.mulf %32, %41 : vector<16x32xf32>
    %c0_12 = arith.constant 0 : index
    %c512 = arith.constant 512 : index
    %43 = vector.load %arg2[%c0_12, %c512] : memref<32x1024xf32, #tpu.memory_space<vmem>>, vector<32x128xf32>
    %c0_13 = arith.constant 0 : index
    %c0_14 = arith.constant 0 : index
    %44 = vector.load %arg5[%c0_13, %c0_14] : memref<8x128xf32, #tpu.memory_space<vmem>>, vector<1x128xf32>
    %c0_15 = arith.constant 0 : index
    %c0_16 = arith.constant 0 : index
    %45 = vector.load %arg3[%c0_15, %c0_16] : memref<64x384xf32, #tpu.memory_space<vmem>>, vector<64x32xf32>
    %c4 = arith.constant 4 : index
    %c0_17 = arith.constant 0 : index
    %46 = vector.load %arg5[%c4, %c0_17] : memref<8x128xf32, #tpu.memory_space<vmem>>, vector<1x32xf32>
    %cst_18 = arith.constant dense<0.000000e+00> : vector<16x128xf32>
    %47 = tpu.matmul %42, %43, %cst_18 {dimension_numbers = #tpu.dot_dimension_numbers<[1], [0], [0], [1], [0, 0, 1, 1], [], []>} : vector<16x32xf32>, vector<32x128xf32>, vector<16x128xf32> -> vector<16x128xf32>
    %48 = vector.broadcast %44 : vector<1x128xf32> to vector<16x128xf32>
    %49 = arith.addf %47, %48 : vector<16x128xf32>
    %50 = vector.extract_strided_slice %49 {offsets = [0, 0], sizes = [16, 64], strides = [1, 1]} : vector<16x128xf32> to vector<16x64xf32>
    %51 = vector.extract_strided_slice %49 {offsets = [0, 64], sizes = [16, 64], strides = [1, 1]} : vector<16x128xf32> to vector<16x64xf32>
    %52 = arith.negf %51 : vector<16x64xf32>
    %53 = math.exp %52 : vector<16x64xf32>
    %cst_19 = arith.constant 1.000000e+00 : f32
    %54 = vector.broadcast %cst_19 : f32 to vector<16x64xf32>
    %55 = arith.addf %54, %53 : vector<16x64xf32>
    %56 = arith.divf %54, %55 : vector<16x64xf32>
    %57 = arith.mulf %51, %56 : vector<16x64xf32>
    %58 = arith.mulf %50, %57 : vector<16x64xf32>
    %cst_20 = arith.constant dense<0.000000e+00> : vector<16x32xf32>
    %59 = tpu.matmul %58, %45, %cst_20 {dimension_numbers = #tpu.dot_dimension_numbers<[1], [0], [0], [1], [0, 0, 1, 1], [], []>} : vector<16x64xf32>, vector<64x32xf32>, vector<16x32xf32> -> vector<16x32xf32>
    %60 = vector.broadcast %46 : vector<1x32xf32> to vector<16x32xf32>
    %61 = arith.addf %59, %60 : vector<16x32xf32>
    %62 = arith.addf %32, %61 : vector<16x32xf32>
    %63 = arith.addf %62, %0 : vector<16x32xf32>
    %64 = arith.mulf %63, %63 : vector<16x32xf32>
    %cst_21 = arith.constant dense<0.000000e+00> : vector<16xf32>
    %65 = vector.multi_reduction <add>, %64, %cst_21 [1] : vector<16x32xf32> to vector<16xf32>
    %66 = vector.shape_cast %65 : vector<16xf32> to vector<16x1xf32>
    %cst_22 = arith.constant 3.200000e+01 : f32
    %67 = vector.broadcast %cst_22 : f32 to vector<16x1xf32>
    %68 = arith.divf %66, %67 : vector<16x1xf32>
    %cst_23 = arith.constant 9.99999974E-6 : f32
    %69 = vector.broadcast %cst_23 : f32 to vector<16x1xf32>
    %70 = arith.addf %68, %69 : vector<16x1xf32>
    %71 = math.rsqrt %70 : vector<16x1xf32>
    %72 = vector.broadcast %71 : vector<16x1xf32> to vector<16x32xf32>
    %73 = arith.mulf %63, %72 : vector<16x32xf32>
    %c0_24 = arith.constant 0 : index
    %c768 = arith.constant 768 : index
    %74 = vector.load %arg2[%c0_24, %c768] : memref<32x1024xf32, #tpu.memory_space<vmem>>, vector<32x96xf32>
    %cst_25 = arith.constant dense<0.000000e+00> : vector<16x96xf32>
    %75 = tpu.matmul %73, %74, %cst_25 {dimension_numbers = #tpu.dot_dimension_numbers<[1], [0], [0], [1], [0, 0, 1, 1], [], []>} : vector<16x32xf32>, vector<32x96xf32>, vector<16x96xf32> -> vector<16x96xf32>
    %c2 = arith.constant 2 : index
    %c0_26 = arith.constant 0 : index
    %76 = vector.load %arg5[%c2, %c0_26] : memref<8x128xf32, #tpu.memory_space<vmem>>, vector<1x96xf32>
    %77 = vector.broadcast %76 : vector<1x96xf32> to vector<16x96xf32>
    %78 = arith.addf %75, %77 : vector<16x96xf32>
    %79 = vector.extract_strided_slice %78 {offsets = [0, 0], sizes = [16, 32], strides = [1, 1]} : vector<16x96xf32> to vector<16x32xf32>
    %80 = vector.extract_strided_slice %78 {offsets = [0, 32], sizes = [16, 32], strides = [1, 1]} : vector<16x96xf32> to vector<16x32xf32>
    %81 = vector.extract_strided_slice %78 {offsets = [0, 64], sizes = [16, 32], strides = [1, 1]} : vector<16x96xf32> to vector<16x32xf32>
    %c0_27 = arith.constant 0 : index
    %c256 = arith.constant 256 : index
    %82 = vector.load %arg3[%c0_27, %c256] : memref<64x384xf32, #tpu.memory_space<vmem>>, vector<64x32xf32>
    %83 = tpu.concatenate %80, %80, %80, %80 in 0 : vector<16x32xf32>, vector<16x32xf32>, vector<16x32xf32>, vector<16x32xf32> -> vector<64x32xf32>
    %84 = arith.mulf %83, %82 : vector<64x32xf32>
    %85 = tpu.concatenate %81, %81, %81, %81 in 0 : vector<16x32xf32>, vector<16x32xf32>, vector<16x32xf32>, vector<16x32xf32> -> vector<64x32xf32>
    %86 = arith.mulf %85, %82 : vector<64x32xf32>
    "tpu.trace_start"() <{level = 10 : i32, message = "qd,cd->qc"}> : () -> ()
    %cst_28 = arith.constant dense<0.000000e+00> : vector<16x64xf32>
    %87 = tpu.matmul %79, %84, %cst_28 {dimension_numbers = #tpu.dot_dimension_numbers<[1], [1], [0], [0], [0, 0, 1, 0], [], []>} : vector<16x32xf32>, vector<64x32xf32>, vector<16x64xf32> -> vector<16x64xf32>
    "tpu.trace_stop"() : () -> ()
    %c0_29 = arith.constant 0 : index
    %c256_30 = arith.constant 256 : index
    %88 = vector.load %arg4[%c0_29, %c256_30] : memref<16x384xf32, #tpu.memory_space<vmem>>, vector<16x64xf32>
    %89 = arith.addf %87, %88 : vector<16x64xf32>
    %cst_31 = arith.constant dense<0xFF800000> : vector<16xf32>
    %90 = vector.multi_reduction <maximumf>, %89, %cst_31 [1] : vector<16x64xf32> to vector<16xf32>
    %91 = vector.shape_cast %90 : vector<16xf32> to vector<16x1xf32>
    %92 = vector.broadcast %91 : vector<16x1xf32> to vector<16x64xf32>
    %93 = arith.subf %89, %92 : vector<16x64xf32>
    %94 = math.exp %93 : vector<16x64xf32>
    %cst_32 = arith.constant dense<0.000000e+00> : vector<16x32xf32>
    %95 = tpu.matmul %94, %86, %cst_32 {dimension_numbers = #tpu.dot_dimension_numbers<[1], [0], [0], [1], [0, 0, 1, 1], [], []>} : vector<16x64xf32>, vector<64x32xf32>, vector<16x32xf32> -> vector<16x32xf32>
    %cst_33 = arith.constant dense<0.000000e+00> : vector<16x32xf32>
    %96 = tpu.matmul %94, %82, %cst_33 {dimension_numbers = #tpu.dot_dimension_numbers<[1], [0], [0], [1], [0, 0, 1, 1], [], []>} : vector<16x64xf32>, vector<64x32xf32>, vector<16x32xf32> -> vector<16x32xf32>
    %97 = tpu.reciprocal %96 {approx = true} : vector<16x32xf32> -> vector<16x32xf32>
    %98 = arith.mulf %95, %97 : vector<16x32xf32>
    %c0_34 = arith.constant 0 : index
    %c896 = arith.constant 896 : index
    %99 = vector.load %arg2[%c0_34, %c896] : memref<32x1024xf32, #tpu.memory_space<vmem>>, vector<32x32xf32>
    %cst_35 = arith.constant dense<0.000000e+00> : vector<16x32xf32>
    %100 = tpu.matmul %98, %99, %cst_35 {dimension_numbers = #tpu.dot_dimension_numbers<[1], [0], [0], [1], [0, 0, 1, 1], [], []>} : vector<16x32xf32>, vector<32x32xf32>, vector<16x32xf32> -> vector<16x32xf32>
    %101 = arith.addf %63, %100 : vector<16x32xf32>
    %c3 = arith.constant 3 : index
    %c0_36 = arith.constant 0 : index
    %102 = vector.load %arg5[%c3, %c0_36] : memref<8x128xf32, #tpu.memory_space<vmem>>, vector<1x32xf32>
    %103 = vector.broadcast %102 : vector<1x32xf32> to vector<16x32xf32>
    %104 = arith.addf %101, %103 : vector<16x32xf32>
    %105 = arith.mulf %104, %104 : vector<16x32xf32>
    %cst_37 = arith.constant dense<0.000000e+00> : vector<16xf32>
    %106 = vector.multi_reduction <add>, %105, %cst_37 [1] : vector<16x32xf32> to vector<16xf32>
    %107 = vector.shape_cast %106 : vector<16xf32> to vector<16x1xf32>
    %cst_38 = arith.constant 3.200000e+01 : f32
    %108 = vector.broadcast %cst_38 : f32 to vector<16x1xf32>
    %109 = arith.divf %107, %108 : vector<16x1xf32>
    %cst_39 = arith.constant 9.99999974E-6 : f32
    %110 = vector.broadcast %cst_39 : f32 to vector<16x1xf32>
    %111 = arith.addf %109, %110 : vector<16x1xf32>
    %112 = math.rsqrt %111 : vector<16x1xf32>
    %113 = vector.broadcast %112 : vector<16x1xf32> to vector<16x32xf32>
    %114 = arith.mulf %104, %113 : vector<16x32xf32>
    %c0_40 = arith.constant 0 : index
    %c640 = arith.constant 640 : index
    %115 = vector.load %arg2[%c0_40, %c640] : memref<32x1024xf32, #tpu.memory_space<vmem>>, vector<32x128xf32>
    %c1 = arith.constant 1 : index
    %c0_41 = arith.constant 0 : index
    %116 = vector.load %arg5[%c1, %c0_41] : memref<8x128xf32, #tpu.memory_space<vmem>>, vector<1x128xf32>
    %c0_42 = arith.constant 0 : index
    %c128 = arith.constant 128 : index
    %117 = vector.load %arg3[%c0_42, %c128] : memref<64x384xf32, #tpu.memory_space<vmem>>, vector<64x32xf32>
    %c5 = arith.constant 5 : index
    %c0_43 = arith.constant 0 : index
    %118 = vector.load %arg5[%c5, %c0_43] : memref<8x128xf32, #tpu.memory_space<vmem>>, vector<1x32xf32>
    %cst_44 = arith.constant dense<0.000000e+00> : vector<16x128xf32>
    %119 = tpu.matmul %114, %115, %cst_44 {dimension_numbers = #tpu.dot_dimension_numbers<[1], [0], [0], [1], [0, 0, 1, 1], [], []>} : vector<16x32xf32>, vector<32x128xf32>, vector<16x128xf32> -> vector<16x128xf32>
    %120 = vector.broadcast %116 : vector<1x128xf32> to vector<16x128xf32>
    %121 = arith.addf %119, %120 : vector<16x128xf32>
    %122 = vector.extract_strided_slice %121 {offsets = [0, 0], sizes = [16, 64], strides = [1, 1]} : vector<16x128xf32> to vector<16x64xf32>
    %123 = vector.extract_strided_slice %121 {offsets = [0, 64], sizes = [16, 64], strides = [1, 1]} : vector<16x128xf32> to vector<16x64xf32>
    %124 = arith.negf %123 : vector<16x64xf32>
    %125 = math.exp %124 : vector<16x64xf32>
    %cst_45 = arith.constant 1.000000e+00 : f32
    %126 = vector.broadcast %cst_45 : f32 to vector<16x64xf32>
    %127 = arith.addf %126, %125 : vector<16x64xf32>
    %128 = arith.divf %126, %127 : vector<16x64xf32>
    %129 = arith.mulf %123, %128 : vector<16x64xf32>
    %130 = arith.mulf %122, %129 : vector<16x64xf32>
    %cst_46 = arith.constant dense<0.000000e+00> : vector<16x32xf32>
    %131 = tpu.matmul %130, %117, %cst_46 {dimension_numbers = #tpu.dot_dimension_numbers<[1], [0], [0], [1], [0, 0, 1, 1], [], []>} : vector<16x64xf32>, vector<64x32xf32>, vector<16x32xf32> -> vector<16x32xf32>
    %132 = vector.broadcast %118 : vector<1x32xf32> to vector<16x32xf32>
    %133 = arith.addf %131, %132 : vector<16x32xf32>
    %134 = arith.addf %104, %133 : vector<16x32xf32>
    %135 = arith.addf %134, %0 : vector<16x32xf32>
    %c0_47 = arith.constant 0 : index
    %c0_48 = arith.constant 0 : index
    %136 = vector.load %arg6[%c0_47, %c0_48] : memref<16x32xf32, #tpu.memory_space<vmem>>, vector<16x32xf32>
    tpu.vector_store %arg6[%c0_47, %c0_48], %135 {strides = array<i32>} : memref<16x32xf32, #tpu.memory_space<vmem>>, vector<16x32xf32>,
    return
  }
  func.func @transform_0(%arg0: i32) -> (i32, i32) {
    %c0_i32 = arith.constant 0 : i32
    %c0_i32_0 = arith.constant 0 : i32
    %c0_i32_1 = arith.constant 0 : i32
    return %c0_i32, %c0_i32_0 : i32, i32
  }
  func.func @transform_1(%arg0: i32) -> (i32, i32) {
    %c0_i32 = arith.constant 0 : i32
    %c0_i32_0 = arith.constant 0 : i32
    %c0_i32_1 = arith.constant 0 : i32
    return %c0_i32, %c0_i32_0 : i32, i32
  }
  func.func @transform_2(%arg0: i32) -> (i32, i32) {
    %c0_i32 = arith.constant 0 : i32
    %c0_i32_0 = arith.constant 0 : i32
    %c0_i32_1 = arith.constant 0 : i32
    return %c0_i32, %c0_i32_0 : i32, i32
  }
  func.func @transform_3(%arg0: i32) -> (i32, i32) {
    %c0_i32 = arith.constant 0 : i32
    %c0_i32_0 = arith.constant 0 : i32
    %c0_i32_1 = arith.constant 0 : i32
    return %c0_i32, %c0_i32_0 : i32, i32
  }
  func.func @transform_4(%arg0: i32) -> (i32, i32) {
    %c0_i32 = arith.constant 0 : i32
    %c0_i32_0 = arith.constant 0 : i32
    %c0_i32_1 = arith.constant 0 : i32
    return %c0_i32, %c0_i32_0 : i32, i32
  }
  func.func @transform_5(%arg0: i32) -> (i32, i32) {
    %c0_i32 = arith.constant 0 : i32
    %c0_i32_0 = arith.constant 0 : i32
    %c0_i32_1 = arith.constant 0 : i32
    return %c0_i32, %c0_i32_0 : i32, i32
  }
}

</mosaic_0001>

<llo_original>
// kernel: hybrid_block.1
$region0: #{hybrid_block.1}
  #allocation0 [shape = 'u32[]', space=smem, size = 0x4, offset = 0x4, fixed_abs, tag = 'smem constant byte address 0x4 - core index']
  #allocation1 [shape = 'u32[72,128]{1,0:T(1,128)}', space=vmem, size = 0x9000, scoped, tag = 'internal scratch']
  %s0 = inlined_call_operand.hbm [shape: f32[16,32], index: 0, kind: input, shape index: {}]
  %s1 = inlined_call_operand.hbm [shape: f32[32,1024], index: 1, kind: input, shape index: {}]
  %s2 = inlined_call_operand.hbm [shape: f32[64,384], index: 2, kind: input, shape index: {}]
  %s3 = inlined_call_operand.hbm [shape: f32[16,384], index: 3, kind: input, shape index: {}]
  %s4 = inlined_call_operand.hbm [shape: f32[8,128], index: 4, kind: input, shape index: {}]
  %s5 = inlined_call_operand.hbm [shape: f32[16,32], index: 5, kind: output, shape index: {}]
  %s6 = sld [smem:[#allocation0]]
  $region50: #{hybrid_block.1} parent=0
    _
  %s8 = ssub.s32 1, %s6
  %s9 = scalar_select 0, %s8, %s6
  $region1: #{hybrid_block.1} parent=0
    #allocation2 [shape = 'u8[8192]{0}', space=vmem, size = 0x2000, scoped, tag = 'input window, operand 0, single buffered']
    #allocation3 [shape = 's32[1]{0}', space=sflag, size = 0x4, scoped, tag = 'scoped memory for hybrid_block.1']
    #allocation4 [shape = 's32[1]{0}', space=sflag, size = 0x4, scoped, tag = 'scoped memory for hybrid_block.1']
    #allocation5 [shape = 'u8[131072]{0}', space=vmem, size = 0x20000, scoped, tag = 'input window, operand 1, single buffered']
    #allocation6 [shape = 's32[1]{0}', space=sflag, size = 0x4, scoped, tag = 'scoped memory for hybrid_block.1']
    #allocation7 [shape = 'u8[98304]{0}', space=vmem, size = 0x18000, scoped, tag = 'input window, operand 2, single buffered']
    #allocation8 [shape = 'u8[24576]{0}', space=vmem, size = 0x6000, scoped, tag = 'input window, operand 3, single buffered']
    #allocation9 [shape = 's32[1]{0}', space=sflag, size = 0x4, scoped, tag = 'scoped memory for hybrid_block.1']
    #allocation10 [shape = 'u8[4096]{0}', space=vmem, size = 0x1000, scoped, tag = 'input window, operand 4, single buffered']
    #allocation11 [shape = 'u8[8192]{0}', space=vmem, size = 0x2000, scoped, tag = 'output window, operand 0, single buffered']
    %10 = vsyncpa [#allocation3], 0
    %11 = vsyncpa [#allocation6], 0
    %12 = vsyncpa [#allocation9], 0
    %13 = vsyncpa [#allocation4], 0
    // Predicated region
    $region2: #{hybrid_block.1} parent=1 // pred_check
      _
    $region3: #{hybrid_block.1} parent=1 // pred_check_branch
      %15 = sbr.rel (0) target = $region5
    $region4: #{hybrid_block.1} parent=1 // pred_region
      %17 = vsyncadd [#allocation3], 0
      %s18 = sshll.u32 %s0, 4
      %s19 = int_to_ptr.hbm [resolvable:$true] %s18
      %s20 = sshll.u32 [#allocation2], 4
      %s21 = int_to_ptr.vmem [resolvable:$true] %s20
      %26 = dma.hbm_to_vmem [thread:$0]  %s19, 256, %s21, [#allocation3], 128, 128, 8
    $region5: #{hybrid_block.1} parent=1 // pred_fallthru
      _
    // Predicated region
    $region6: #{hybrid_block.1} parent=1 // pred_check
      _
    $region7: #{hybrid_block.1} parent=1 // pred_check_branch
      %28 = sbr.rel (0) target = $region9
    $region8: #{hybrid_block.1} parent=1 // pred_region
      %30 = vsyncadd [#allocation6], 0
      %s31 = sshll.u32 %s1, 4
      %s32 = int_to_ptr.hbm [resolvable:$true] %s31
      %s33 = sshll.u32 [#allocation5], 4
      %s34 = int_to_ptr.vmem [resolvable:$true] %s33
      %39 = dma.hbm_to_vmem [thread:$0]  %s32, 4096, %s34, [#allocation6], 1024, 1024, 64
    $region9: #{hybrid_block.1} parent=1 // pred_fallthru
      _
    // Predicated region
    $region10: #{hybrid_block.1} parent=1 // pred_check
      _
    $region11: #{hybrid_block.1} parent=1 // pred_check_branch
      %41 = sbr.rel (0) target = $region13
    $region12: #{hybrid_block.1} parent=1 // pred_region
      %43 = vsyncadd [#allocation6], 0
      %s44 = sshll.u32 %s2, 4
      %s45 = int_to_ptr.hbm [resolvable:$true] %s44
      %s46 = sshll.u32 [#allocation7], 4
      %s47 = int_to_ptr.vmem [resolvable:$true] %s46
      %52 = dma.hbm_to_vmem [thread:$0]  %s45, 3072, %s47, [#allocation6], 384, 384, 24
    $region13: #{hybrid_block.1} parent=1 // pred_fallthru
      _
    // Predicated region
    $region14: #{hybrid_block.1} parent=1 // pred_check
      _
    $region15: #{hybrid_block.1} parent=1 // pred_check_branch
      %54 = sbr.rel (0) target = $region17
    $region16: #{hybrid_block.1} parent=1 // pred_region
      %56 = vsyncadd [#allocation9], 0
      %s57 = sshll.u32 %s3, 4
      %s58 = int_to_ptr.hbm [resolvable:$true] %s57
      %s59 = sshll.u32 [#allocation8], 4
      %s60 = int_to_ptr.vmem [resolvable:$true] %s59
      %65 = dma.hbm_to_vmem [thread:$0]  %s58, 768, %s60, [#allocation9], 384, 384, 24
    $region17: #{hybrid_block.1} parent=1 // pred_fallthru
      _
    // Predicated region
    $region18: #{hybrid_block.1} parent=1 // pred_check
      _
    $region19: #{hybrid_block.1} parent=1 // pred_check_branch
      %67 = sbr.rel (0) target = $region21
    $region20: #{hybrid_block.1} parent=1 // pred_region
      %69 = vsyncadd [#allocation9], 0
      %s71 = sshll.u32 %s4, 4
      %s72 = int_to_ptr.hbm [resolvable:$true] %s71
      %s73 = sshll.u32 [#allocation10], 4
      %s74 = int_to_ptr.vmem [resolvable:$true] %s73
      %76 = dma.hbm_to_vmem [thread:$0]  %s72, 128, %s74, [#allocation9]
    $region21: #{hybrid_block.1} parent=1 // pred_fallthru
      _
    // Predicated region
    $region22: #{hybrid_block.1} parent=1 // pred_check
      _
    $region23: #{hybrid_block.1} parent=1 // pred_check_branch
      %78 = sbr.rel (0) target = $region25
    $region24: #{hybrid_block.1} parent=1 // pred_region
      %80 = dma.done [#allocation3], 256
    $region25: #{hybrid_block.1} parent=1 // pred_fallthru
      _
    // Predicated region
    $region26: #{hybrid_block.1} parent=1 // pred_check
      _
    $region27: #{hybrid_block.1} parent=1 // pred_check_branch
      %82 = sbr.rel (0) target = $region29
    $region28: #{hybrid_block.1} parent=1 // pred_region
      %84 = dma.done [#allocation6], 4096
    $region29: #{hybrid_block.1} parent=1 // pred_fallthru
      _
    // Predicated region
    $region30: #{hybrid_block.1} parent=1 // pred_check
      _
    $region31: #{hybrid_block.1} parent=1 // pred_check_branch
      %86 = sbr.rel (0) target = $region33
    $region32: #{hybrid_block.1} parent=1 // pred_region
      %88 = dma.done [#allocation6], 3072
    $region33: #{hybrid_block.1} parent=1 // pred_fallthru
      _
    // Predicated region
    $region34: #{hybrid_block.1} parent=1 // pred_check
      _
    $region35: #{hybrid_block.1} parent=1 // pred_check_branch
      %90 = sbr.rel (0) target = $region37
    $region36: #{hybrid_block.1} parent=1 // pred_region
      %92 = dma.done [#allocation9], 768
    $region37: #{hybrid_block.1} parent=1 // pred_fallthru
      _
    // Predicated region
    $region38: #{hybrid_block.1} parent=1 // pred_check
      _
    $region39: #{hybrid_block.1} parent=1 // pred_check_branch
      %94 = sbr.rel (0) target = $region41
    $region40: #{hybrid_block.1} parent=1 // pred_region
      %96 = dma.done [#allocation9], 128
    $region41: #{hybrid_block.1} parent=1 // pred_fallthru
      _
    %v97 = vld [vmem:[#allocation2] sm:$0xff]
    %v98 = vld [vmem:[#allocation2 + $0x8] sm:$0xff]
    %v99 = vmul.f32 %v97, %v97
    %v100 = vmul.f32 %v98, %v98
    %vm101 = vcmask 261120
    %v102 = vsel %vm101, %v99, 0.0
    %103 = vadd.xlane.f32.xlu0 %v102
    %v104 = vpop.xlane.xlu0 %103
    %v105 = vsel %vm101, %v100, 0.0
    %106 = vadd.xlane.f32.xlu0 %v105
    %v107 = vpop.xlane.xlu0 %106
    %v108 = vrcp.pop 32.0
    %v109 = vmul.f32 32.0, %v108
    %v110 = vsub.f32 1.0, %v109
    %v111 = vmul.f32 %v108, %v110
    %v112 = vadd.f32 %v108, %v111
    %vm113 = vweird.f32 %v108
    %v114 = vsel %vm113, %v108, %v112
    %v115 = vmul.f32 %v104, %v114
    %v116 = vmul.f32 %v107, %v114
    %v117 = vadd.f32 %v115, 1e-05
    %v118 = vadd.f32 %v116, 1e-05
    %v119 = vrsqrt.pop %v117
    %v120 = vmul.f32 %v119, %v117
    %v121 = vmul.f32 %v120, %v119
    %v122 = vmul.f32 0.5, %v121
    %v123 = vsub.f32 1.5, %v122
    %v124 = vmul.f32 %v119, %v123
    %vm125 = vweird.f32 %v117
    %vm126 = vweird.f32 %v119
    %vm127 = vmor %vm125, %vm126
    %v128 = vsel %vm127, %v119, %v124
    %v129 = vrsqrt.pop %v118
    %v130 = vmul.f32 %v129, %v118
    %v131 = vmul.f32 %v130, %v129
    %v132 = vmul.f32 0.5, %v131
    %v133 = vsub.f32 1.5, %v132
    %v134 = vmul.f32 %v129, %v133
    %vm135 = vweird.f32 %v118
    %vm136 = vweird.f32 %v129
    %vm137 = vmor %vm135, %vm136
    %v138 = vsel %vm137, %v129, %v134
    %v139 = vmul.f32 %v97, %v128
    %v140 = vmul.f32 %v98, %v138
    %v141 = vld [vmem:[#allocation5] sm:$0xff]
    %v142 = vld [vmem:[#allocation5 + $0x8] sm:$0xff]
    %v143 = vld [vmem:[#allocation5 + $0x10] sm:$0xff]
    %v144 = vld [vmem:[#allocation5 + $0x18] sm:$0xff]
    %v145 = vld [vmem:[#allocation5 + $0x40] sm:$0xff]
    %v146 = vld [vmem:[#allocation5 + $0x48] sm:$0xff]
    %v147 = vld [vmem:[#allocation5 + $0x50] sm:$0xff]
    %v148 = vld [vmem:[#allocation5 + $0x58] sm:$0xff]
    %v149 = vld [vmem:[#allocation5 + $0x80] sm:$0xff]
    %v150 = vld [vmem:[#allocation5 + $0x88] sm:$0xff]
    %v151 = vld [vmem:[#allocation5 + $0x90] sm:$0xff]
    %v152 = vld [vmem:[#allocation5 + $0x98] sm:$0xff]
    %v153 = vld [vmem:[#allocation5 + $0xc0] sm:$0xff]
    %v154 = vld [vmem:[#allocation5 + $0xc8] sm:$0xff]
    %v155 = vld [vmem:[#allocation5 + $0xd0] sm:$0xff]
    %v156 = vld [vmem:[#allocation5 + $0xd8] sm:$0xff]
    %v158 = vsel %vm101, %v139, 0
    %v161 = vsel %vm101, %v140, 0
    %163 = vmatpush.msra.mxu0 0.0
    %164 = vmatpush.msra.mxu0 0.0
    %165 = vmatpush.msra.mxu0 0.0
    %166 = vmatpush.msra.mxu0 0.0
    %167 = vmatpush.msra.mxu0 0.0
    %168 = vmatpush.msra.mxu0 0.0
    %169 = vmatpush.msra.mxu0 0.0
    %170 = vmatpush.msra.mxu0 0.0
    %171 = vmatpush.msra.mxu0 0.0
    %172 = vmatpush.msra.mxu0 0.0
    %173 = vmatpush.msra.mxu0 0.0
    %174 = vmatpush.msra.mxu0 0.0
    %175 = vmatpush.msra.mxu0 %v153
    %176 = vmatpush.msra.mxu0 %v149
    %177 = vmatpush.msra.mxu0 %v145
    %178 = vmatpush.msra.mxu0 %v141
    %179 = vmatmul.f32.gmra.mxu0 %v158
    %v180 = vpop.f32.mrf.mxu0
    %v181 = vadd.f32 0.0, %v180
    %182 = vmatmul.f32.gmra.mxu0 %v161
    %v183 = vpop.f32.mrf.mxu0
    %v184 = vadd.f32 0.0, %v183
    %185 = vdwg.mxu0
    %186 = vmatpush.msra.mxu0 0.0
    %187 = vmatpush.msra.mxu0 0.0
    %188 = vmatpush.msra.mxu0 0.0
    %189 = vmatpush.msra.mxu0 0.0
    %190 = vmatpush.msra.mxu0 0.0
    %191 = vmatpush.msra.mxu0 0.0
    %192 = vmatpush.msra.mxu0 0.0
    %193 = vmatpush.msra.mxu0 0.0
    %194 = vmatpush.msra.mxu0 0.0
    %195 = vmatpush.msra.mxu0 0.0
    %196 = vmatpush.msra.mxu0 0.0
    %197 = vmatpush.msra.mxu0 0.0
    %198 = vmatpush.msra.mxu0 %v154
    %199 = vmatpush.msra.mxu0 %v150
    %200 = vmatpush.msra.mxu0 %v146
    %201 = vmatpush.msra.mxu0 %v142
    %202 = vmatmul.f32.gmra.mxu0 %v158
    %v203 = vpop.f32.mrf.mxu0
    %v204 = vadd.f32 0.0, %v203
    %205 = vmatmul.f32.gmra.mxu0 %v161
    %v206 = vpop.f32.mrf.mxu0
    %v207 = vadd.f32 0.0, %v206
    %208 = vdwg.mxu0
    %209 = vmatpush.msra.mxu0 0.0
    %210 = vmatpush.msra.mxu0 0.0
    %211 = vmatpush.msra.mxu0 0.0
    %212 = vmatpush.msra.mxu0 0.0
    %213 = vmatpush.msra.mxu0 0.0
    %214 = vmatpush.msra.mxu0 0.0
    %215 = vmatpush.msra.mxu0 0.0
    %216 = vmatpush.msra.mxu0 0.0
    %217 = vmatpush.msra.mxu0 0.0
    %218 = vmatpush.msra.mxu0 0.0
    %219 = vmatpush.msra.mxu0 0.0
    %220 = vmatpush.msra.mxu0 0.0
    %221 = vmatpush.msra.mxu0 %v155
    %222 = vmatpush.msra.mxu0 %v151
    %223 = vmatpush.msra.mxu0 %v147
    %224 = vmatpush.msra.mxu0 %v143
    %225 = vmatmul.f32.gmra.mxu0 %v158
    %v226 = vpop.f32.mrf.mxu0
    %v227 = vadd.f32 0.0, %v226
    %228 = vmatmul.f32.gmra.mxu0 %v161
    %v229 = vpop.f32.mrf.mxu0
    %v230 = vadd.f32 0.0, %v229
    %231 = vdwg.mxu0
    %232 = vmatpush.msra.mxu0 0.0
    %233 = vmatpush.msra.mxu0 0.0
    %234 = vmatpush.msra.mxu0 0.0
    %235 = vmatpush.msra.mxu0 0.0
    %236 = vmatpush.msra.mxu0 0.0
    %237 = vmatpush.msra.mxu0 0.0
    %238 = vmatpush.msra.mxu0 0.0
    %239 = vmatpush.msra.mxu0 0.0
    %240 = vmatpush.msra.mxu0 0.0
    %241 = vmatpush.msra.mxu0 0.0
    %242 = vmatpush.msra.mxu0 0.0
    %243 = vmatpush.msra.mxu0 0.0
    %244 = vmatpush.msra.mxu0 %v156
    %245 = vmatpush.msra.mxu0 %v152
    %246 = vmatpush.msra.mxu0 %v148
    %247 = vmatpush.msra.mxu0 %v144
    %248 = vmatmul.f32.gmra.mxu0 %v158
    %v249 = vpop.f32.mrf.mxu0
    %v250 = vadd.f32 0.0, %v249
    %251 = vmatmul.f32.gmra.mxu0 %v161
    %v252 = vpop.f32.mrf.mxu0
    %v253 = vadd.f32 0.0, %v252
    %254 = vdwg.mxu0
    %257 = vrot.lane.b32.xlu0 %v181, 96
    %v258 = vpop.permute.xlu0 %257
    %259 = vrot.lane.b32.xlu0 %v184, 96
    %v260 = vpop.permute.xlu0 %259
    %263 = vrot.lane.b32.xlu0 %v181, 64
    %v264 = vpop.permute.xlu0 %263
    %265 = vrot.lane.b32.xlu0 %v184, 64
    %v266 = vpop.permute.xlu0 %265
    %269 = vrot.lane.b32.xlu0 %v181, 32
    %v270 = vpop.permute.xlu0 %269
    %271 = vrot.lane.b32.xlu0 %v184, 32
    %v272 = vpop.permute.xlu0 %271
    %277 = vrot.lane.b32.xlu0 %v204, 96
    %v278 = vpop.permute.xlu0 %277
    %279 = vrot.lane.b32.xlu0 %v207, 96
    %v280 = vpop.permute.xlu0 %279
    %283 = vrot.lane.b32.xlu0 %v204, 64
    %v284 = vpop.permute.xlu0 %283
    %285 = vrot.lane.b32.xlu0 %v207, 64
    %v286 = vpop.permute.xlu0 %285
    %289 = vrot.lane.b32.xlu0 %v204, 32
    %v290 = vpop.permute.xlu0 %289
    %291 = vrot.lane.b32.xlu0 %v207, 32
    %v292 = vpop.permute.xlu0 %291
    %297 = vrot.lane.b32.xlu0 %v227, 96
    %v298 = vpop.permute.xlu0 %297
    %299 = vrot.lane.b32.xlu0 %v230, 96
    %v300 = vpop.permute.xlu0 %299
    %303 = vrot.lane.b32.xlu0 %v227, 64
    %v304 = vpop.permute.xlu0 %303
    %305 = vrot.lane.b32.xlu0 %v230, 64
    %v306 = vpop.permute.xlu0 %305
    %309 = vrot.lane.b32.xlu0 %v227, 32
    %v310 = vpop.permute.xlu0 %309
    %311 = vrot.lane.b32.xlu0 %v230, 32
    %v312 = vpop.permute.xlu0 %311
    %317 = vrot.lane.b32.xlu0 %v250, 96
    %v318 = vpop.permute.xlu0 %317
    %319 = vrot.lane.b32.xlu0 %v253, 96
    %v320 = vpop.permute.xlu0 %319
    %323 = vrot.lane.b32.xlu0 %v250, 64
    %v324 = vpop.permute.xlu0 %323
    %325 = vrot.lane.b32.xlu0 %v253, 64
    %v326 = vpop.permute.xlu0 %325
    %329 = vrot.lane.b32.xlu0 %v250, 32
    %v330 = vpop.permute.xlu0 %329
    %331 = vrot.lane.b32.xlu0 %v253, 32
    %v332 = vpop.permute.xlu0 %331
    %v335 = vld [vmem:[#allocation8] sm:$0xff]
    %v336 = vld [vmem:[#allocation8 + $0x8] sm:$0xff]
    %v337 = vld [vmem:[#allocation8 + $0x18] sm:$0xff]
    %v338 = vld [vmem:[#allocation8 + $0x20] sm:$0xff]
    %339 = vmatpush.msra.mxu0 %v292
    %340 = vmatpush.msra.mxu0 %v290
    %341 = vmatpush.msra.mxu0 %v286
    %342 = vmatpush.msra.mxu0 %v284
    %343 = vmatpush.msra.mxu0 %v280
    %344 = vmatpush.msra.mxu0 %v278
    %345 = vmatpush.msra.mxu0 %v207
    %346 = vmatpush.msra.mxu0 %v204
    %347 = vmatpush.msra.mxu0 %v272
    %348 = vmatpush.msra.mxu0 %v270
    %349 = vmatpush.msra.mxu0 %v266
    %350 = vmatpush.msra.mxu0 %v264
    %351 = vmatpush.msra.mxu0 %v260
    %352 = vmatpush.msra.mxu0 %v258
    %353 = vmatpush.msra.mxu0 %v184
    %354 = vmatpush.msra.mxu0 %v181
    %355 = vmatmul.f32.gmra.mxu0 %v335
    %v356 = vpop.f32.mrf.mxu0
    %v357 = vadd.f32 0.0, %v356
    %358 = vmatmul.f32.gmra.mxu0 %v337
    %v359 = vpop.f32.mrf.mxu0
    %v360 = vadd.f32 0.0, %v359
    %361 = vdwg.mxu0
    %362 = vmatpush.msra.mxu0 %v332
    %363 = vmatpush.msra.mxu0 %v330
    %364 = vmatpush.msra.mxu0 %v326
    %365 = vmatpush.msra.mxu0 %v324
    %366 = vmatpush.msra.mxu0 %v320
    %367 = vmatpush.msra.mxu0 %v318
    %368 = vmatpush.msra.mxu0 %v253
    %369 = vmatpush.msra.mxu0 %v250
    %370 = vmatpush.msra.mxu0 %v312
    %371 = vmatpush.msra.mxu0 %v310
    %372 = vmatpush.msra.mxu0 %v306
    %373 = vmatpush.msra.mxu0 %v304
    %374 = vmatpush.msra.mxu0 %v300
    %375 = vmatpush.msra.mxu0 %v298
    %376 = vmatpush.msra.mxu0 %v230
    %377 = vmatpush.msra.mxu0 %v227
    %378 = vmatmul.f32.gmra.mxu0 %v336
    %v379 = vpop.f32.mrf.mxu0
    %v380 = vadd.f32 %v357, %v379
    %381 = vmatmul.f32.gmra.mxu0 %v338
    %v382 = vpop.f32.mrf.mxu0
    %v383 = vadd.f32 %v360, %v382
    %384 = vdwg.mxu0
    %v385 = vadd.f32 %v97, %v380
    %v386 = vadd.f32 %v98, %v383
    %v387 = vmul.f32 %v385, %v385
    %v388 = vmul.f32 %v386, %v386
    %v389 = vsel %vm101, %v387, 0.0
    %390 = vadd.xlane.f32.xlu0 %v389
    %v391 = vpop.xlane.xlu0 %390
    %v392 = vsel %vm101, %v388, 0.0
    %393 = vadd.xlane.f32.xlu0 %v392
    %v394 = vpop.xlane.xlu0 %393
    %v395 = vmul.f32 %v391, %v114
    %v396 = vmul.f32 %v394, %v114
    %v397 = vadd.f32 %v395, 1e-05
    %v398 = vadd.f32 %v396, 1e-05
    %v399 = vrsqrt.pop %v397
    %v400 = vmul.f32 %v399, %v397
    %v401 = vmul.f32 %v400, %v399
    %v402 = vmul.f32 0.5, %v401
    %v403 = vsub.f32 1.5, %v402
    %v404 = vmul.f32 %v399, %v403
    %vm405 = vweird.f32 %v397
    %vm406 = vweird.f32 %v399
    %vm407 = vmor %vm405, %vm406
    %v408 = vsel %vm407, %v399, %v404
    %v409 = vrsqrt.pop %v398
    %v410 = vmul.f32 %v409, %v398
    %v411 = vmul.f32 %v410, %v409
    %v412 = vmul.f32 0.5, %v411
    %v413 = vsub.f32 1.5, %v412
    %v414 = vmul.f32 %v409, %v413
    %vm415 = vweird.f32 %v398
    %vm416 = vweird.f32 %v409
    %vm417 = vmor %vm415, %vm416
    %v418 = vsel %vm417, %v409, %v414
    %v419 = vmul.f32 %v385, %v408
    %v420 = vmul.f32 %v386, %v418
    %v421 = vld [vmem:[#allocation5 + $0x20] sm:$0xff]
    %v422 = vld [vmem:[#allocation5 + $0x60] sm:$0xff]
    %v423 = vld [vmem:[#allocation5 + $0xa0] sm:$0xff]
    %v424 = vld [vmem:[#allocation5 + $0xe0] sm:$0xff]
    %v425 = vld [vmem:[#allocation10] sm:$0x1]
    %v426 = vld [vmem:[#allocation7] sm:$0xff]
    %v427 = vld [vmem:[#allocation7 + $0x18] sm:$0xff]
    %v428 = vld [vmem:[#allocation7 + $0x30] sm:$0xff]
    %v429 = vld [vmem:[#allocation7 + $0x48] sm:$0xff]
    %v430 = vld [vmem:[#allocation7 + $0x60] sm:$0xff]
    %v431 = vld [vmem:[#allocation7 + $0x78] sm:$0xff]
    %v432 = vld [vmem:[#allocation7 + $0x90] sm:$0xff]
    %v433 = vld [vmem:[#allocation7 + $0xa8] sm:$0xff]
    %v434 = vld [vmem:[#allocation10 + $0x4] sm:$0x1]
    %v435 = vperm.slane %v425, 0
    %v437 = vsel %vm101, %v419, 0
    %v440 = vsel %vm101, %v420, 0
    %442 = vmatpush.msra.mxu0 0.0
    %443 = vmatpush.msra.mxu0 0.0
    %444 = vmatpush.msra.mxu0 0.0
    %445 = vmatpush.msra.mxu0 0.0
    %446 = vmatpush.msra.mxu0 0.0
    %447 = vmatpush.msra.mxu0 0.0
    %448 = vmatpush.msra.mxu0 0.0
    %449 = vmatpush.msra.mxu0 0.0
    %450 = vmatpush.msra.mxu0 0.0
    %451 = vmatpush.msra.mxu0 0.0
    %452 = vmatpush.msra.mxu0 0.0
    %453 = vmatpush.msra.mxu0 0.0
    %454 = vmatpush.msra.mxu0 %v424
    %455 = vmatpush.msra.mxu0 %v423
    %456 = vmatpush.msra.mxu0 %v422
    %457 = vmatpush.msra.mxu0 %v421
    %458 = vmatmul.f32.gmra.mxu0 %v437
    %v459 = vpop.f32.mrf.mxu0
    %v460 = vadd.f32 %v435, %v459
    %461 = vmatmul.f32.gmra.mxu0 %v440
    %v462 = vpop.f32.mrf.mxu0
    %v463 = vadd.f32 %v435, %v462
    %464 = vdwg.mxu0
    %v465 = vxor.u32 %v460, 2147483648
    %v466 = vxor.u32 %v463, 2147483648
    %v467 = vmul.f32 %v465, 1.442695
    %v468 = vpow.pop %v467
    %v469 = vmul.f32 %v466, 1.442695
    %v470 = vpow.pop %v469
    %v471 = vadd.f32 %v468, 1.0
    %v472 = vadd.f32 %v470, 1.0
    %v473 = vrcp.pop %v471
    %v474 = vmul.f32 %v471, %v473
    %v475 = vsub.f32 1.0, %v474
    %v476 = vmul.f32 %v473, %v475
    %v477 = vadd.f32 %v473, %v476
    %vm478 = vweird.f32 %v471
    %vm479 = vweird.f32 %v473
    %vm480 = vmor %vm478, %vm479
    %v481 = vsel %vm480, %v473, %v477
    %v482 = vand.u32 2147483647, %v471
    %vm483 = vcmp.eq.f32.partialorder %v482, 8.507059e+37
    %v484 = vand.u32 %v471, 2147483648
    %v485 = vor.u32 1.1754944e-38, %v484
    %v486 = vsel %vm483, %v485, %v481
    %v487 = vmul.f32 1.0, %v486
    %v488 = vrcp.pop %v472
    %v489 = vmul.f32 %v472, %v488
    %v490 = vsub.f32 1.0, %v489
    %v491 = vmul.f32 %v488, %v490
    %v492 = vadd.f32 %v488, %v491
    %vm493 = vweird.f32 %v472
    %vm494 = vweird.f32 %v488
    %vm495 = vmor %vm493, %vm494
    %v496 = vsel %vm495, %v488, %v492
    %v497 = vand.u32 2147483647, %v472
    %vm498 = vcmp.eq.f32.partialorder %v497, 8.507059e+37
    %v499 = vand.u32 %v472, 2147483648
    %v500 = vor.u32 1.1754944e-38, %v499
    %v501 = vsel %vm498, %v500, %v496
    %v502 = vmul.f32 1.0, %v501
    %v503 = vmul.f32 %v460, %v487
    %v504 = vmul.f32 %v463, %v502
    %507 = vrot.lane.b32.xlu0 %v503, 64
    %v508 = vpop.permute.xlu0 %507
    %509 = vrot.lane.b32.xlu0 %v504, 64
    %v510 = vpop.permute.xlu0 %509
    %v513 = vmul.f32 %v460, %v508
    %v514 = vmul.f32 %v463, %v510
    %v515 = vperm.slane %v434, 0
    %vm516 = vcmask 523264
    %v518 = vsel %vm516, %v513, 0
    %v521 = vsel %vm516, %v514, 0
    %523 = vmatpush.msra.mxu0 0.0
    %524 = vmatpush.msra.mxu0 0.0
    %525 = vmatpush.msra.mxu0 0.0
    %526 = vmatpush.msra.mxu0 0.0
    %527 = vmatpush.msra.mxu0 0.0
    %528 = vmatpush.msra.mxu0 0.0
    %529 = vmatpush.msra.mxu0 0.0
    %530 = vmatpush.msra.mxu0 0.0
    %531 = vmatpush.msra.mxu0 %v433
    %532 = vmatpush.msra.mxu0 %v432
    %533 = vmatpush.msra.mxu0 %v431
    %534 = vmatpush.msra.mxu0 %v430
    %535 = vmatpush.msra.mxu0 %v429
    %536 = vmatpush.msra.mxu0 %v428
    %537 = vmatpush.msra.mxu0 %v427
    %538 = vmatpush.msra.mxu0 %v426
    %539 = vmatmul.f32.gmra.mxu0 %v518
    %v540 = vpop.f32.mrf.mxu0
    %v541 = vadd.f32 %v515, %v540
    %542 = vmatmul.f32.gmra.mxu0 %v521
    %v543 = vpop.f32.mrf.mxu0
    %v544 = vadd.f32 %v515, %v543
    %545 = vdwg.mxu0
    %v546 = vadd.f32 %v385, %v541
    %v547 = vadd.f32 %v386, %v544
    %v548 = vadd.f32 %v546, %v97
    %v549 = vadd.f32 %v547, %v98
    %v550 = vmul.f32 %v548, %v548
    %v551 = vmul.f32 %v549, %v549
    %v552 = vsel %vm101, %v550, 0.0
    %553 = vadd.xlane.f32.xlu0 %v552
    %v554 = vpop.xlane.xlu0 %553
    %v555 = vsel %vm101, %v551, 0.0
    %556 = vadd.xlane.f32.xlu0 %v555
    %v557 = vpop.xlane.xlu0 %556
    %v558 = vmul.f32 %v554, %v114
    %v559 = vmul.f32 %v557, %v114
    %v560 = vadd.f32 %v558, 1e-05
    %v561 = vadd.f32 %v559, 1e-05
    %v562 = vrsqrt.pop %v560
    %v563 = vmul.f32 %v562, %v560
    %v564 = vmul.f32 %v563, %v562
    %v565 = vmul.f32 0.5, %v564
    %v566 = vsub.f32 1.5, %v565
    %v567 = vmul.f32 %v562, %v566
    %vm568 = vweird.f32 %v560
    %vm569 = vweird.f32 %v562
    %vm570 = vmor %vm568, %vm569
    %v571 = vsel %vm570, %v562, %v567
    %v572 = vrsqrt.pop %v561
    %v573 = vmul.f32 %v572, %v561
    %v574 = vmul.f32 %v573, %v572
    %v575 = vmul.f32 0.5, %v574
    %v576 = vsub.f32 1.5, %v575
    %v577 = vmul.f32 %v572, %v576
    %vm578 = vweird.f32 %v561
    %vm579 = vweird.f32 %v572
    %vm580 = vmor %vm578, %vm579
    %v581 = vsel %vm580, %v572, %v577
    %v582 = vmul.f32 %v548, %v571
    %v583 = vmul.f32 %v549, %v581
    %v584 = vld [vmem:[#allocation5 + $0x30] sm:$0xff]
    %v585 = vld [vmem:[#allocation5 + $0x70] sm:$0xff]
    %v586 = vld [vmem:[#allocation5 + $0xb0] sm:$0xff]
    %v587 = vld [vmem:[#allocation5 + $0xf0] sm:$0xff]
    %v588 = vld [vmem:[#allocation10 + $0x2] sm:$0x1]
    %v589 = vperm.slane %v588, 0
    %v591 = vsel %vm101, %v582, 0
    %v594 = vsel %vm101, %v583, 0
    %596 = vmatpush.msra.mxu0 0.0
    %597 = vmatpush.msra.mxu0 0.0
    %598 = vmatpush.msra.mxu0 0.0
    %599 = vmatpush.msra.mxu0 0.0
    %600 = vmatpush.msra.mxu0 0.0
    %601 = vmatpush.msra.mxu0 0.0
    %602 = vmatpush.msra.mxu0 0.0
    %603 = vmatpush.msra.mxu0 0.0
    %604 = vmatpush.msra.mxu0 0.0
    %605 = vmatpush.msra.mxu0 0.0
    %606 = vmatpush.msra.mxu0 0.0
    %607 = vmatpush.msra.mxu0 0.0
    %608 = vmatpush.msra.mxu0 %v587
    %609 = vmatpush.msra.mxu0 %v586
    %610 = vmatpush.msra.mxu0 %v585
    %611 = vmatpush.msra.mxu0 %v584
    %612 = vmatmul.f32.gmra.mxu0 %v591
    %v613 = vpop.f32.mrf.mxu0
    %v614 = vadd.f32 %v589, %v613
    %615 = vmatmul.f32.gmra.mxu0 %v594
    %v616 = vpop.f32.mrf.mxu0
    %v617 = vadd.f32 %v589, %v616
    %618 = vdwg.mxu0
    %v619 = vld [vmem:[#allocation7 + $0x10] sm:$0xff]
    %v620 = vld [vmem:[#allocation7 + $0x28] sm:$0xff]
    %v621 = vld [vmem:[#allocation7 + $0x40] sm:$0xff]
    %v622 = vld [vmem:[#allocation7 + $0x58] sm:$0xff]
    %v623 = vld [vmem:[#allocation7 + $0x70] sm:$0xff]
    %v624 = vld [vmem:[#allocation7 + $0x88] sm:$0xff]
    %v625 = vld [vmem:[#allocation7 + $0xa0] sm:$0xff]
    %v626 = vld [vmem:[#allocation7 + $0xb8] sm:$0xff]
    %635 = vrot.lane.b32.xlu0 %v619, 32
    %v636 = vpop.permute.xlu0 %635
    %637 = vrot.lane.b32.xlu0 %v620, 32
    %v638 = vpop.permute.xlu0 %637
    %639 = vrot.lane.b32.xlu0 %v621, 32
    %v640 = vpop.permute.xlu0 %639
    %641 = vrot.lane.b32.xlu0 %v622, 32
    %v642 = vpop.permute.xlu0 %641
    %643 = vrot.lane.b32.xlu0 %v623, 32
    %v644 = vpop.permute.xlu0 %643
    %645 = vrot.lane.b32.xlu0 %v624, 32
    %v646 = vpop.permute.xlu0 %645
    %647 = vrot.lane.b32.xlu0 %v625, 32
    %v648 = vpop.permute.xlu0 %647
    %649 = vrot.lane.b32.xlu0 %v626, 32
    %v650 = vpop.permute.xlu0 %649
    %v659 = vmul.f32 %v614, %v636
    %v660 = vmul.f32 %v617, %v638
    %v661 = vmul.f32 %v614, %v640
    %v662 = vmul.f32 %v617, %v642
    %v663 = vmul.f32 %v614, %v644
    %v664 = vmul.f32 %v617, %v646
    %v665 = vmul.f32 %v614, %v648
    %v666 = vmul.f32 %v617, %v650
    %667 = vrot.lane.b32.xlu0 %v619, 64
    %v668 = vpop.permute.xlu0 %667
    %669 = vrot.lane.b32.xlu0 %v620, 64
    %v670 = vpop.permute.xlu0 %669
    %671 = vrot.lane.b32.xlu0 %v621, 64
    %v672 = vpop.permute.xlu0 %671
    %673 = vrot.lane.b32.xlu0 %v622, 64
    %v674 = vpop.permute.xlu0 %673
    %675 = vrot.lane.b32.xlu0 %v623, 64
    %v676 = vpop.permute.xlu0 %675
    %677 = vrot.lane.b32.xlu0 %v624, 64
    %v678 = vpop.permute.xlu0 %677
    %679 = vrot.lane.b32.xlu0 %v625, 64
    %v680 = vpop.permute.xlu0 %679
    %681 = vrot.lane.b32.xlu0 %v626, 64
    %v682 = vpop.permute.xlu0 %681
    %v691 = vmul.f32 %v614, %v668
    %v692 = vmul.f32 %v617, %v670
    %v693 = vmul.f32 %v614, %v672
    %v694 = vmul.f32 %v617, %v674
    %v695 = vmul.f32 %v614, %v676
    %v696 = vmul.f32 %v617, %v678
    %v697 = vmul.f32 %v614, %v680
    %v698 = vmul.f32 %v617, %v682
    %v699 = vld [vmem:[#allocation8 + $0x10] sm:$0xff]
    %v700 = vld [vmem:[#allocation8 + $0x28] sm:$0xff]
    %709 = vrot.lane.b32.xlu0 %v659, 96
    %v710 = vpop.permute.xlu0 %709
    %711 = vrot.lane.b32.xlu0 %v660, 96
    %v712 = vpop.permute.xlu0 %711
    %713 = vrot.lane.b32.xlu0 %v661, 96
    %v714 = vpop.permute.xlu0 %713
    %715 = vrot.lane.b32.xlu0 %v662, 96
    %v716 = vpop.permute.xlu0 %715
    %717 = vrot.lane.b32.xlu0 %v663, 96
    %v718 = vpop.permute.xlu0 %717
    %719 = vrot.lane.b32.xlu0 %v664, 96
    %v720 = vpop.permute.xlu0 %719
    %721 = vrot.lane.b32.xlu0 %v665, 96
    %v722 = vpop.permute.xlu0 %721
    %723 = vrot.lane.b32.xlu0 %v666, 96
    %v724 = vpop.permute.xlu0 %723
    %v726 = vsel %vm101, %v614, 0
    %v729 = vsel %vm101, %v617, 0
    %v731 = vsel %vm101, %v710, 0
    %v733 = vsel %vm101, %v712, 0
    %v735 = vsel %vm101, %v714, 0
    %v737 = vsel %vm101, %v716, 0
    %v739 = vsel %vm101, %v718, 0
    %v741 = vsel %vm101, %v720, 0
    %v743 = vsel %vm101, %v722, 0
    %v745 = vsel %vm101, %v724, 0
    %747 = vmatpush.xpose.msra.mxu0 0.0
    %748 = vmatpush.xpose.msra.mxu0 0.0
    %749 = vmatpush.xpose.msra.mxu0 0.0
    %750 = vmatpush.xpose.msra.mxu0 0.0
    %751 = vmatpush.xpose.msra.mxu0 0.0
    %752 = vmatpush.xpose.msra.mxu0 0.0
    %753 = vmatpush.xpose.msra.mxu0 0.0
    %754 = vmatpush.xpose.msra.mxu0 0.0
    %755 = vmatpush.xpose.msra.mxu0 %v745
    %756 = vmatpush.xpose.msra.mxu0 %v743
    %757 = vmatpush.xpose.msra.mxu0 %v741
    %758 = vmatpush.xpose.msra.mxu0 %v739
    %759 = vmatpush.xpose.msra.mxu0 %v737
    %760 = vmatpush.xpose.msra.mxu0 %v735
    %761 = vmatpush.xpose.msra.mxu0 %v733
    %762 = vmatpush.xpose.msra.mxu0 %v731
    %763 = vmatmul.f32.gmra.mxu0 %v726
    %v764 = vpop.f32.mrf.mxu0
    %v765 = vadd.f32 %v699, %v764
    %766 = vmatmul.f32.gmra.mxu0 %v729
    %v767 = vpop.f32.mrf.mxu0
    %v768 = vadd.f32 %v700, %v767
    %769 = vdwg.mxu0
    %v770 = vsel %vm516, %v765, -inf
    %771 = vmax.xlane.f32.xlu0 %v770
    %v772 = vpop.xlane.xlu0 %771
    %v773 = vsel %vm516, %v768, -inf
    %774 = vmax.xlane.f32.xlu0 %v773
    %v775 = vpop.xlane.xlu0 %774
    %v776 = vsub.f32 %v765, %v772
    %v777 = vsub.f32 %v768, %v775
    %v778 = vmul.f32 %v776, 1.442695
    %v779 = vpow.pop %v778
    %v780 = vmul.f32 %v777, 1.442695
    %v781 = vpow.pop %v780
    %790 = vrot.lane.b32.xlu0 %v691, 64
    %v791 = vpop.permute.xlu0 %790
    %792 = vrot.lane.b32.xlu0 %v692, 64
    %v793 = vpop.permute.xlu0 %792
    %794 = vrot.lane.b32.xlu0 %v693, 64
    %v795 = vpop.permute.xlu0 %794
    %796 = vrot.lane.b32.xlu0 %v694, 64
    %v797 = vpop.permute.xlu0 %796
    %798 = vrot.lane.b32.xlu0 %v695, 64
    %v799 = vpop.permute.xlu0 %798
    %800 = vrot.lane.b32.xlu0 %v696, 64
    %v801 = vpop.permute.xlu0 %800
    %802 = vrot.lane.b32.xlu0 %v697, 64
    %v803 = vpop.permute.xlu0 %802
    %804 = vrot.lane.b32.xlu0 %v698, 64
    %v805 = vpop.permute.xlu0 %804
    %v815 = vsel %vm516, %v779, 0
    %v818 = vsel %vm516, %v781, 0
    %820 = vmatpush.msra.mxu0 0.0
    %821 = vmatpush.msra.mxu0 0.0
    %822 = vmatpush.msra.mxu0 0.0
    %823 = vmatpush.msra.mxu0 0.0
    %824 = vmatpush.msra.mxu0 0.0
    %825 = vmatpush.msra.mxu0 0.0
    %826 = vmatpush.msra.mxu0 0.0
    %827 = vmatpush.msra.mxu0 0.0
    %828 = vmatpush.msra.mxu0 %v805
    %829 = vmatpush.msra.mxu0 %v803
    %830 = vmatpush.msra.mxu0 %v801
    %831 = vmatpush.msra.mxu0 %v799
    %832 = vmatpush.msra.mxu0 %v797
    %833 = vmatpush.msra.mxu0 %v795
    %834 = vmatpush.msra.mxu0 %v793
    %835 = vmatpush.msra.mxu0 %v791
    %836 = vmatmul.f32.gmra.mxu0 %v815
    %v837 = vpop.f32.mrf.mxu0
    %v838 = vadd.f32 0.0, %v837
    %839 = vmatmul.f32.gmra.mxu0 %v818
    %v840 = vpop.f32.mrf.mxu0
    %v841 = vadd.f32 0.0, %v840
    %842 = vdwg.mxu0
    %843 = vmatpush.msra.mxu0 0.0
    %844 = vmatpush.msra.mxu0 0.0
    %845 = vmatpush.msra.mxu0 0.0
    %846 = vmatpush.msra.mxu0 0.0
    %847 = vmatpush.msra.mxu0 0.0
    %848 = vmatpush.msra.mxu0 0.0
    %849 = vmatpush.msra.mxu0 0.0
    %850 = vmatpush.msra.mxu0 0.0
    %851 = vmatpush.msra.mxu0 %v626
    %852 = vmatpush.msra.mxu0 %v625
    %853 = vmatpush.msra.mxu0 %v624
    %854 = vmatpush.msra.mxu0 %v623
    %855 = vmatpush.msra.mxu0 %v622
    %856 = vmatpush.msra.mxu0 %v621
    %857 = vmatpush.msra.mxu0 %v620
    %858 = vmatpush.msra.mxu0 %v619
    %859 = vmatmul.f32.gmra.mxu0 %v815
    %v860 = vpop.f32.mrf.mxu0
    %v861 = vadd.f32 0.0, %v860
    %862 = vmatmul.f32.gmra.mxu0 %v818
    %v863 = vpop.f32.mrf.mxu0
    %v864 = vadd.f32 0.0, %v863
    %865 = vdwg.mxu0
    %v866 = vrcp.pop %v861
    %v867 = vrcp.pop %v864
    %v868 = vmul.f32 %v838, %v866
    %v869 = vmul.f32 %v841, %v867
    %v870 = vld [vmem:[#allocation5 + $0x38] sm:$0xff]
    %v871 = vld [vmem:[#allocation5 + $0x78] sm:$0xff]
    %v872 = vld [vmem:[#allocation5 + $0xb8] sm:$0xff]
    %v873 = vld [vmem:[#allocation5 + $0xf8] sm:$0xff]
    %v875 = vsel %vm101, %v868, 0
    %v878 = vsel %vm101, %v869, 0
    %880 = vmatpush.msra.mxu0 0.0
    %881 = vmatpush.msra.mxu0 0.0
    %882 = vmatpush.msra.mxu0 0.0
    %883 = vmatpush.msra.mxu0 0.0
    %884 = vmatpush.msra.mxu0 0.0
    %885 = vmatpush.msra.mxu0 0.0
    %886 = vmatpush.msra.mxu0 0.0
    %887 = vmatpush.msra.mxu0 0.0
    %888 = vmatpush.msra.mxu0 0.0
    %889 = vmatpush.msra.mxu0 0.0
    %890 = vmatpush.msra.mxu0 0.0
    %891 = vmatpush.msra.mxu0 0.0
    %892 = vmatpush.msra.mxu0 %v873
    %893 = vmatpush.msra.mxu0 %v872
    %894 = vmatpush.msra.mxu0 %v871
    %895 = vmatpush.msra.mxu0 %v870
    %896 = vmatmul.f32.gmra.mxu0 %v875
    %v897 = vpop.f32.mrf.mxu0
    %v898 = vadd.f32 0.0, %v897
    %899 = vmatmul.f32.gmra.mxu0 %v878
    %v900 = vpop.f32.mrf.mxu0
    %v901 = vadd.f32 0.0, %v900
    %902 = vdwg.mxu0
    %v903 = vadd.f32 %v548, %v898
    %v904 = vadd.f32 %v549, %v901
    %v905 = vld [vmem:[#allocation10 + $0x3] sm:$0x1]
    %v906 = vperm.slane %v905, 0
    %v907 = vadd.f32 %v903, %v906
    %v908 = vadd.f32 %v904, %v906
    %v909 = vmul.f32 %v907, %v907
    %v910 = vmul.f32 %v908, %v908
    %v911 = vsel %vm101, %v909, 0.0
    %912 = vadd.xlane.f32.xlu0 %v911
    %v913 = vpop.xlane.xlu0 %912
    %v914 = vsel %vm101, %v910, 0.0
    %915 = vadd.xlane.f32.xlu0 %v914
    %v916 = vpop.xlane.xlu0 %915
    %v917 = vmul.f32 %v913, %v114
    %v918 = vmul.f32 %v916, %v114
    %v919 = vadd.f32 %v917, 1e-05
    %v920 = vadd.f32 %v918, 1e-05
    %v921 = vrsqrt.pop %v919
    %v922 = vmul.f32 %v921, %v919
    %v923 = vmul.f32 %v922, %v921
    %v924 = vmul.f32 0.5, %v923
    %v925 = vsub.f32 1.5, %v924
    %v926 = vmul.f32 %v921, %v925
    %vm927 = vweird.f32 %v919
    %vm928 = vweird.f32 %v921
    %vm929 = vmor %vm927, %vm928
    %v930 = vsel %vm929, %v921, %v926
    %v931 = vrsqrt.pop %v920
    %v932 = vmul.f32 %v931, %v920
    %v933 = vmul.f32 %v932, %v931
    %v934 = vmul.f32 0.5, %v933
    %v935 = vsub.f32 1.5, %v934
    %v936 = vmul.f32 %v931, %v935
    %vm937 = vweird.f32 %v920
    %vm938 = vweird.f32 %v931
    %vm939 = vmor %vm937, %vm938
    %v940 = vsel %vm939, %v931, %v936
    %v941 = vmul.f32 %v907, %v930
    %v942 = vmul.f32 %v908, %v940
    %v943 = vld [vmem:[#allocation5 + $0x28] sm:$0xff]
    %v944 = vld [vmem:[#allocation5 + $0x68] sm:$0xff]
    %v945 = vld [vmem:[#allocation5 + $0xa8] sm:$0xff]
    %v946 = vld [vmem:[#allocation5 + $0xe8] sm:$0xff]
    %v947 = vld [vmem:[#allocation10 + $0x1] sm:$0x1]
    %v948 = vld [vmem:[#allocation7 + $0x8] sm:$0xff]
    %v949 = vld [vmem:[#allocation7 + $0x20] sm:$0xff]
    %v950 = vld [vmem:[#allocation7 + $0x38] sm:$0xff]
    %v951 = vld [vmem:[#allocation7 + $0x50] sm:$0xff]
    %v952 = vld [vmem:[#allocation7 + $0x68] sm:$0xff]
    %v953 = vld [vmem:[#allocation7 + $0x80] sm:$0xff]
    %v954 = vld [vmem:[#allocation7 + $0x98] sm:$0xff]
    %v955 = vld [vmem:[#allocation7 + $0xb0] sm:$0xff]
    %v956 = vld [vmem:[#allocation10 + $0x5] sm:$0x1]
    %v957 = vperm.slane %v947, 0
    %v959 = vsel %vm101, %v941, 0
    %v962 = vsel %vm101, %v942, 0
    %964 = vmatpush.msra.mxu0 0.0
    %965 = vmatpush.msra.mxu0 0.0
    %966 = vmatpush.msra.mxu0 0.0
    %967 = vmatpush.msra.mxu0 0.0
    %968 = vmatpush.msra.mxu0 0.0
    %969 = vmatpush.msra.mxu0 0.0
    %970 = vmatpush.msra.mxu0 0.0
    %971 = vmatpush.msra.mxu0 0.0
    %972 = vmatpush.msra.mxu0 0.0
    %973 = vmatpush.msra.mxu0 0.0
    %974 = vmatpush.msra.mxu0 0.0
    %975 = vmatpush.msra.mxu0 0.0
    %976 = vmatpush.msra.mxu0 %v946
    %977 = vmatpush.msra.mxu0 %v945
    %978 = vmatpush.msra.mxu0 %v944
    %979 = vmatpush.msra.mxu0 %v943
    %980 = vmatmul.f32.gmra.mxu0 %v959
    %v981 = vpop.f32.mrf.mxu0
    %v982 = vadd.f32 %v957, %v981
    %983 = vmatmul.f32.gmra.mxu0 %v962
    %v984 = vpop.f32.mrf.mxu0
    %v985 = vadd.f32 %v957, %v984
    %986 = vdwg.mxu0
    %v987 = vxor.u32 %v982, 2147483648
    %v988 = vxor.u32 %v985, 2147483648
    %v989 = vmul.f32 %v987, 1.442695
    %v990 = vpow.pop %v989
    %v991 = vmul.f32 %v988, 1.442695
    %v992 = vpow.pop %v991
    %v993 = vadd.f32 %v990, 1.0
    %v994 = vadd.f32 %v992, 1.0
    %v995 = vrcp.pop %v993
    %v996 = vmul.f32 %v993, %v995
    %v997 = vsub.f32 1.0, %v996
    %v998 = vmul.f32 %v995, %v997
    %v999 = vadd.f32 %v995, %v998
    %vm1000 = vweird.f32 %v993
    %vm1001 = vweird.f32 %v995
    %vm1002 = vmor %vm1000, %vm1001
    %v1003 = vsel %vm1002, %v995, %v999
    %v1004 = vand.u32 2147483647, %v993
    %vm1005 = vcmp.eq.f32.partialorder %v1004, 8.507059e+37
    %v1006 = vand.u32 %v993, 2147483648
    %v1007 = vor.u32 1.1754944e-38, %v1006
    %v1008 = vsel %vm1005, %v1007, %v1003
    %v1009 = vmul.f32 1.0, %v1008
    %v1010 = vrcp.pop %v994
    %v1011 = vmul.f32 %v994, %v1010
    %v1012 = vsub.f32 1.0, %v1011
    %v1013 = vmul.f32 %v1010, %v1012
    %v1014 = vadd.f32 %v1010, %v1013
    %vm1015 = vweird.f32 %v994
    %vm1016 = vweird.f32 %v1010
    %vm1017 = vmor %vm1015, %vm1016
    %v1018 = vsel %vm1017, %v1010, %v1014
    %v1019 = vand.u32 2147483647, %v994
    %vm1020 = vcmp.eq.f32.partialorder %v1019, 8.507059e+37
    %v1021 = vand.u32 %v994, 2147483648
    %v1022 = vor.u32 1.1754944e-38, %v1021
    %v1023 = vsel %vm1020, %v1022, %v1018
    %v1024 = vmul.f32 1.0, %v1023
    %v1025 = vmul.f32 %v982, %v1009
    %v1026 = vmul.f32 %v985, %v1024
    %1029 = vrot.lane.b32.xlu0 %v1025, 64
    %v1030 = vpop.permute.xlu0 %1029
    %1031 = vrot.lane.b32.xlu0 %v1026, 64
    %v1032 = vpop.permute.xlu0 %1031
    %v1035 = vmul.f32 %v982, %v1030
    %v1036 = vmul.f32 %v985, %v1032
    %v1037 = vperm.slane %v956, 0
    %v1039 = vsel %vm516, %v1035, 0
    %v1042 = vsel %vm516, %v1036, 0
    %1044 = vmatpush.msra.mxu0 0.0
    %1045 = vmatpush.msra.mxu0 0.0
    %1046 = vmatpush.msra.mxu0 0.0
    %1047 = vmatpush.msra.mxu0 0.0
    %1048 = vmatpush.msra.mxu0 0.0
    %1049 = vmatpush.msra.mxu0 0.0
    %1050 = vmatpush.msra.mxu0 0.0
    %1051 = vmatpush.msra.mxu0 0.0
    %1052 = vmatpush.msra.mxu0 %v955
    %1053 = vmatpush.msra.mxu0 %v954
    %1054 = vmatpush.msra.mxu0 %v953
    %1055 = vmatpush.msra.mxu0 %v952
    %1056 = vmatpush.msra.mxu0 %v951
    %1057 = vmatpush.msra.mxu0 %v950
    %1058 = vmatpush.msra.mxu0 %v949
    %1059 = vmatpush.msra.mxu0 %v948
    %1060 = vmatmul.f32.gmra.mxu0 %v1039
    %v1061 = vpop.f32.mrf.mxu0
    %v1062 = vadd.f32 %v1037, %v1061
    %1063 = vmatmul.f32.gmra.mxu0 %v1042
    %v1064 = vpop.f32.mrf.mxu0
    %v1065 = vadd.f32 %v1037, %v1064
    %1066 = vdwg.mxu0
    %v1067 = vadd.f32 %v907, %v1062
    %v1068 = vadd.f32 %v908, %v1065
    %v1069 = vadd.f32 %v1067, %v97
    %v1070 = vadd.f32 %v1068, %v98
    %1071 = vst.msk [vmem:[#allocation11] sm:$0xff] %vm101, %v1069
    %1072 = vst.msk [vmem:[#allocation11 + $0x8] sm:$0xff] %vm101, %v1070
    // Predicated region
    $region42: #{hybrid_block.1} parent=1 // pred_check
      _
    $region43: #{hybrid_block.1} parent=1 // pred_check_branch
      %1074 = sbr.rel (0) target = $region45
    $region44: #{hybrid_block.1} parent=1 // pred_region
      %1076 = vsyncadd [#allocation4], 0
      %s1077 = sshll.u32 [#allocation11], 4
      %s1078 = int_to_ptr.vmem [resolvable:$true] %s1077
      %s1079 = sshll.u32 %s5, 4
      %s1080 = int_to_ptr.hbm [resolvable:$true] %s1079
      %1085 = dma.vmem_to_hbm [thread:$0]  %s1078, 256, %s1080, [#allocation4], 128, 128, 8
    $region45: #{hybrid_block.1} parent=1 // pred_fallthru
      _
    // Predicated region
    $region46: #{hybrid_block.1} parent=1 // pred_check
      _
    $region47: #{hybrid_block.1} parent=1 // pred_check_branch
      %1087 = sbr.rel (0) target = $region49
    $region48: #{hybrid_block.1} parent=1 // pred_region
      %1089 = dma.done [#allocation4], 256
    $region49: #{hybrid_block.1} parent=1 // pred_fallthru
      _
    %1090 = vsyncpa [#allocation3], 1
    %1091 = vsyncpa [#allocation6], 1
    %1092 = vsyncpa [#allocation9], 1
    %1093 = vsyncpa [#allocation4], 1

</llo_original>
